<compile_context>
chip_gen: v6e
topology: v6e:2x2x1
jax: 0.10.0
libtpu: 0.0.40
codegen_flags: <defaults>
</compile_context>

<pallas_src>
import functools

import jax
import jax.numpy as jnp
from jax import lax
from jax.experimental import pallas as pl
from jax.experimental.pallas import tpu as pltpu

LANES = 128
CHUNK_ROWS = 32            # rows per in-kernel sub-chunk (4 f32 vregs / operand)
DEFAULT_TILE_ROWS = 2048   # v5e/v6e: 4 in x 2 buf x 2048x128x4B = 8 MiB VMEM
V7X_TILE_ROWS = 4096       # v7x: 16 MiB double-buffered, fits 64 MiB VMEM


def _round_up(x, m):
    return (x + m - 1) // m * m


def _max_tile_rows():
    """Generation-aware streaming tile height (rows of 128 lanes)."""
    try:
        info = pltpu.get_tpu_info()
        vmem = None
        for name in ("vmem_capacity_bytes", "vmem_size_bytes", "vmem_bytes"):
            vmem = getattr(info, name, None)
            if vmem is not None:
                break
        # 64-MiB-VMEM parts (v7x class) have ~3.2 TB/s HBM per TensorCore, so
        # bigger tiles are needed to hide the fixed per-grid-step overhead.
        if vmem is not None and vmem <= 64 * 1024 * 1024:
            return V7X_TILE_ROWS
    except Exception:
        pass
    return DEFAULT_TILE_ROWS


def _cos_block(a_h, a_v, b_h, b_v, eps):
    """Element-wise cosine similarity of 2-vectors (a_h,a_v) vs (b_h,b_v)."""
    a_h = a_h.astype(jnp.float32)
    a_v = a_v.astype(jnp.float32)
    b_h = b_h.astype(jnp.float32)
    b_v = b_v.astype(jnp.float32)
    dot = a_h * b_h + a_v * b_v
    # Two sqrts match the reference norm1*norm2 exactly (no sqrt(s1*s2)
    # overflow hazard); sqrt lands on the EUP slot which is otherwise idle.
    n1 = jnp.sqrt(a_h * a_h + a_v * a_v)
    n2 = jnp.sqrt(b_h * b_h + b_v * b_v)
    denom = n1 * n2 + eps
    # EUP approx reciprocal + one Newton-Raphson refinement instead of the
    # multi-op exact VALU divide (keeps the kernel DMA-bound on v7x).
    r = pl.reciprocal(denom, approx=True)
    r = r * (2.0 - denom * r)
    return dot * r


def _vreg_sum(x, rows):
    # (rows,128) -> (8,128): whole-vreg adds only (pure VPU, no XLU).
    return x.reshape(rows // 8, 8, LANES).sum(axis=0)


def _cosine_partial_kernel(*refs, eps, chunk, full_chunks_all,
                           full_chunks_last, rem_rows_last, has_tail):
    if has_tail:
        g1h, g1v, g2h, g2v, t1h, t1v, t2h, t2v, out_ref = refs
    else:
        g1h, g1v, g2h, g2v, out_ref = refs
        t1h = t1v = t2h = t2v = None

    is_last = pl.program_id(0) == pl.num_programs(0) - 1

    def chunk_cos(start):
        sl = pl.ds(start, chunk)
        return _cos_block(g1h[sl, :], g1v[sl, :], g2h[sl, :], g2v[sl, :], eps)

    def body(c, acc):
        start = pl.multiple_of(c * chunk, chunk)
        return acc + _vreg_sum(chunk_cos(start), chunk)

    if full_chunks_last == full_chunks_all:       # last block is not ragged
        n_chunks = full_chunks_all
    else:                                         # last block runs fewer chunks
        n_chunks = jnp.where(is_last, full_chunks_last, full_chunks_all)

    acc = lax.fori_loop(0, n_chunks, body, jnp.zeros((8, LANES), jnp.float32))
    out_ref[0] = acc

    # Ragged-edge rows and the <128-element tail are handled only on the last
    # grid step, so steady-state blocks pay no masking cost at all.
    if rem_rows_last > 0 or has_tail:
        @pl.when(is_last)
        def _():
            extra = jnp.zeros((8, LANES), jnp.float32)
            if rem_rows_last > 0:
                cos = chunk_cos(full_chunks_last * chunk)
                row = lax.broadcasted_iota(jnp.int32, (chunk, LANES), 0)
                # select (not multiply): stale VMEM rows may hold NaN/Inf.
                cos = jnp.where(row < rem_rows_last, cos, 0.0)
                extra = extra + _vreg_sum(cos, chunk)
            if has_tail:
                # Zero-padded tail rows give dot=0, denom=eps -> cos=0, so the
                # tail slab needs no mask at all.
                extra = extra + _cos_block(t1h[...], t1v[...],
                                           t2h[...], t2v[...], eps)
            out_ref[0] = acc + extra


def _pairwise_cos_sum(a_h, a_v, b_h, b_v, eps):
    """Plain-jnp fallback (only used when the input has < 128 elements)."""
    a_h = a_h.astype(jnp.float32)
    a_v = a_v.astype(jnp.float32)
    b_h = b_h.astype(jnp.float32)
    b_v = b_v.astype(jnp.float32)
    dot = a_h * b_h + a_v * b_v
    denom = (jnp.sqrt(a_h * a_h + a_v * a_v)
             * jnp.sqrt(b_h * b_h + b_v * b_v) + eps)
    return jnp.sum(dot / denom)


@functools.partial(jax.jit, static_argnames=("eps",))
def gradient_cosine_loss(grad1_h, grad1_v, grad2_h, grad2_v, eps=1e-8):
    assert grad1_h.shape == grad1_v.shape == grad2_h.shape == grad2_v.shape
    n_elems = grad1_h.size
    n_full = (n_elems // LANES) * LANES
    n_rows = n_full // LANES
    n_tail = n_elems - n_full

    flats = [x.reshape(-1) for x in (grad1_h, grad1_v, grad2_h, grad2_v)]

    if n_rows == 0:
        # Tiny input (< 128 elements): no kernel needed.
        total = _pairwise_cos_sum(*flats, eps)
        return 1.0 - total / jnp.float32(n_elems)

    # ---- tile selection: generation-aware, >=2 blocks for v7x's 2 TCs ----
    max_tile = _max_tile_rows()
    tile_rows = min(max_tile, _round_up(n_rows, CHUNK_ROWS))
    if pl.cdiv(n_rows, tile_rows) < 2 and n_rows > 2 * CHUNK_ROWS:
        tile_rows = _round_up(pl.cdiv(n_rows, 2), CHUNK_ROWS)
    num_blocks = pl.cdiv(n_rows, tile_rows)

    last_valid = n_rows - (num_blocks - 1) * tile_rows
    full_chunks_all = tile_rows // CHUNK_ROWS
    full_chunks_last = last_valid // CHUNK_ROWS
    rem_rows_last = last_valid - full_chunks_last * CHUNK_ROWS
    has_tail = n_tail > 0

    mains = [f[:n_full].reshape(n_rows, LANES) for f in flats]
    operands = list(mains)
    in_specs = [pl.BlockSpec((tile_rows, LANES), lambda i: (i, 0))] * 4

    if has_tail:
        # < 128 leftover elements per operand: zero-pad into one tiny (8,128)
        # slab each and fold into the kernel's last grid step.
        tails = [
            jnp.zeros((8 * LANES,), jnp.float32)
            .at[:n_tail].set(f[n_full:].astype(jnp.float32))
            .reshape(8, LANES)
            for f in flats
        ]
        operands += tails
        in_specs += [pl.BlockSpec((8, LANES), lambda i: (0, 0))] * 4

    kernel = functools.partial(
        _cosine_partial_kernel, eps=eps, chunk=CHUNK_ROWS,
        full_chunks_all=full_chunks_all, full_chunks_last=full_chunks_last,
        rem_rows_last=rem_rows_last, has_tail=has_tail)

    itemsize = jnp.dtype(grad1_h.dtype).itemsize
    vmem_limit = max(32 * 1024 * 1024,
                     4 * 2 * tile_rows * LANES * itemsize + (2 << 20))

    partials = pl.pallas_call(
        kernel,
        out_shape=jax.ShapeDtypeStruct((num_blocks, 8, LANES), jnp.float32),
        grid=(num_blocks,),
        in_specs=in_specs,
        out_specs=pl.BlockSpec((1, 8, LANES), lambda i: (i, 0, 0)),
        compiler_params=pltpu.CompilerParams(
            dimension_semantics=("parallel",),
            vmem_limit_bytes=int(vmem_limit)),
    )(*operands)

    total = jnp.sum(partials)
    return 1.0 - total / jnp.float32(n_elems)


def _reference(grad1_h, grad1_v, grad2_h, grad2_v, eps=1e-8):
    g1 = jnp.stack((grad1_h, grad1_v), axis=-1)
    g2 = jnp.stack((grad2_h, grad2_v), axis=-1)
    dot = (g1 * g2).sum(-1)
    n1 = jnp.linalg.norm(g1, axis=-1)
    n2 = jnp.linalg.norm(g2, axis=-1)
    cos = dot / (n1 * n2 + eps)
    return 1.0 - cos.mean()


if __name__ == "__main__":
    key = jax.random.PRNGKey(0)
    k1, k2, k3, k4 = jax.random.split(key, 4)
    shape = (2, 4, 16, 16)  # B, C, H, W
    grad1_h = jax.random.normal(k1, shape, dtype=jnp.float32)
    grad1_v = jax.random.normal(k2, shape, dtype=jnp.float32)
    grad2_h = jax.random.normal(k3, shape, dtype=jnp.float32)
    grad2_v = jax.random.normal(k4, shape, dtype=jnp.float32)

    loss = gradient_cosine_loss(grad1_h, grad1_v, grad2_h, grad2_v)
    jax.block_until_ready(loss)
    ref = _reference(grad1_h, grad1_v, grad2_h, grad2_v)
    assert jnp.allclose(loss, ref, atol=1e-5, rtol=1e-5), (loss, ref)

    # Second check: element count not a multiple of 128 exercises the masked
    # edge chunk (last grid step only) and the in-kernel zero-padded tail.
    shape2 = (2, 3, 13, 7)
    keys2 = jax.random.split(jax.random.PRNGKey(1), 4)
    args2 = [jax.random.normal(k, shape2, dtype=jnp.float32) for k in keys2]
    loss2 = gradient_cosine_loss(*args2)
    jax.block_until_ready(loss2)
    ref2 = _reference(*args2)
    assert jnp.allclose(loss2, ref2, atol=1e-5, rtol=1e-5), (loss2, ref2)

    print("KERNEL_OK")
</pallas_src>

<mosaic_0001>
module attributes {stable_mosaic.version = 11 : i64} {
  func.func @_cosine_partial_kernel(%arg0: i32, %arg1: memref<32x128xf32, #tpu.memory_space<vmem>>, %arg2: memref<32x128xf32, #tpu.memory_space<vmem>>, %arg3: memref<32x128xf32, #tpu.memory_space<vmem>>, %arg4: memref<32x128xf32, #tpu.memory_space<vmem>>, %arg5: memref<1x8x128xf32, #tpu.memory_space<vmem>>) attributes {dimension_semantics = [#tpu.dimension_semantics<parallel>], iteration_bounds = array<i64: 1>, scalar_prefetch = 0 : i64, scratch_operands = 0 : i64, tpu.core_type = #tpu.core_type<tc>, window_params = [{transform_indices = @transform_0, window_bounds = array<i64: 32, 128>}, {transform_indices = @transform_1, window_bounds = array<i64: 32, 128>}, {transform_indices = @transform_2, window_bounds = array<i64: 32, 128>}, {transform_indices = @transform_3, window_bounds = array<i64: 32, 128>}, {transform_indices = @transform_4, window_bounds = array<i64: 1, 8, 128>}]} {
    %c0_i32 = arith.constant 0 : i32
    %0 = arith.cmpi eq, %arg0, %c0_i32 : i32
    %c0_i32_0 = arith.constant 0 : i32
    %c1_i32 = arith.constant 1 : i32
    %1 = arith.select %0, %c0_i32_0, %c1_i32 : i32
    %cst = arith.constant 0.000000e+00 : f32
    %2 = vector.broadcast %cst : f32 to vector<8x128xf32>
    %c0_i32_1 = arith.constant 0 : i32
    %3 = arith.subi %1, %c0_i32_1 : i32
    %4 = arith.addi %c0_i32_1, %3 : i32
    %c1_i32_2 = arith.constant 1 : i32
    %5 = scf.for %arg6 = %c0_i32_1 to %4 step %c1_i32_2 iter_args(%arg7 = %2) -> (vector<8x128xf32>)  : i32 {
      %c32_i32 = arith.constant 32 : i32
      %11 = arith.muli %arg6, %c32_i32 : i32
      %12 = tpu.assume_multiple %11, 32 : i32
      %13 = arith.index_cast %12 : i32 to index
      %c0_6 = arith.constant 0 : index
      %14 = vector.load %arg1[%13, %c0_6] : memref<32x128xf32, #tpu.memory_space<vmem>>, vector<32x128xf32>
      %15 = arith.index_cast %12 : i32 to index
      %c0_7 = arith.constant 0 : index
      %16 = vector.load %arg2[%15, %c0_7] : memref<32x128xf32, #tpu.memory_space<vmem>>, vector<32x128xf32>
      %17 = arith.index_cast %12 : i32 to index
      %c0_8 = arith.constant 0 : index
      %18 = vector.load %arg3[%17, %c0_8] : memref<32x128xf32, #tpu.memory_space<vmem>>, vector<32x128xf32>
      %19 = arith.index_cast %12 : i32 to index
      %c0_9 = arith.constant 0 : index
      %20 = vector.load %arg4[%19, %c0_9] : memref<32x128xf32, #tpu.memory_space<vmem>>, vector<32x128xf32>
      %21 = arith.mulf %14, %18 : vector<32x128xf32>
      %22 = arith.mulf %16, %20 : vector<32x128xf32>
      %23 = arith.addf %21, %22 : vector<32x128xf32>
      %24 = arith.mulf %14, %14 : vector<32x128xf32>
      %25 = arith.mulf %16, %16 : vector<32x128xf32>
      %26 = arith.addf %24, %25 : vector<32x128xf32>
      %27 = math.sqrt %26 : vector<32x128xf32>
      %28 = arith.mulf %18, %18 : vector<32x128xf32>
      %29 = arith.mulf %20, %20 : vector<32x128xf32>
      %30 = arith.addf %28, %29 : vector<32x128xf32>
      %31 = math.sqrt %30 : vector<32x128xf32>
      %32 = arith.mulf %27, %31 : vector<32x128xf32>
      %cst_10 = arith.constant 9.99999993E-9 : f32
      %33 = vector.broadcast %cst_10 : f32 to vector<32x128xf32>
      %34 = arith.addf %32, %33 : vector<32x128xf32>
      %35 = tpu.reciprocal %34 {approx = true} : vector<32x128xf32> -> vector<32x128xf32>
      %36 = arith.mulf %34, %35 : vector<32x128xf32>
      %cst_11 = arith.constant 2.000000e+00 : f32
      %37 = vector.broadcast %cst_11 : f32 to vector<32x128xf32>
      %38 = arith.subf %37, %36 : vector<32x128xf32>
      %39 = arith.mulf %35, %38 : vector<32x128xf32>
      %40 = arith.mulf %23, %39 : vector<32x128xf32>
      %41 = vector.shape_cast %40 : vector<32x128xf32> to vector<4x8x128xf32>
      %cst_12 = arith.constant dense<0.000000e+00> : vector<8x128xf32>
      %42 = vector.multi_reduction <add>, %41, %cst_12 [0] : vector<4x8x128xf32> to vector<8x128xf32>
      %43 = arith.addf %arg7, %42 : vector<8x128xf32>
      scf.yield %43 : vector<8x128xf32>
    }
    %c0 = arith.constant 0 : index
    %c0_3 = arith.constant 0 : index
    %c0_4 = arith.constant 0 : index
    %6 = vector.load %arg5[%c0, %c0_3, %c0_4] : memref<1x8x128xf32, #tpu.memory_space<vmem>>, vector<1x8x128xf32>
    %7 = vector.shape_cast %6 : vector<1x8x128xf32> to vector<8x128xf32>
    %8 = vector.shape_cast %5 : vector<8x128xf32> to vector<1x8x128xf32>
    tpu.vector_store %arg5[%c0, %c0_3, %c0_4], %8 {strides = array<i32>} : memref<1x8x128xf32, #tpu.memory_space<vmem>>, vector<1x8x128xf32>,
    %9 = arith.extui %0 : i1 to i32
    %c0_i32_5 = arith.constant 0 : i32
    %10 = arith.cmpi ne, %9, %c0_i32_5 : i32
    scf.if %10 {
      %cst_6 = arith.constant 0.000000e+00 : f32
      %11 = vector.broadcast %cst_6 : f32 to vector<8x128xf32>
      %c0_7 = arith.constant 0 : index
      %c0_8 = arith.constant 0 : index
      %12 = vector.load %arg1[%c0_7, %c0_8] : memref<32x128xf32, #tpu.memory_space<vmem>>, vector<32x128xf32>
      %c0_9 = arith.constant 0 : index
      %c0_10 = arith.constant 0 : index
      %13 = vector.load %arg2[%c0_9, %c0_10] : memref<32x128xf32, #tpu.memory_space<vmem>>, vector<32x128xf32>
      %c0_11 = arith.constant 0 : index
      %c0_12 = arith.constant 0 : index
      %14 = vector.load %arg3[%c0_11, %c0_12] : memref<32x128xf32, #tpu.memory_space<vmem>>, vector<32x128xf32>
      %c0_13 = arith.constant 0 : index
      %c0_14 = arith.constant 0 : index
      %15 = vector.load %arg4[%c0_13, %c0_14] : memref<32x128xf32, #tpu.memory_space<vmem>>, vector<32x128xf32>
      %16 = arith.mulf %12, %14 : vector<32x128xf32>
      %17 = arith.mulf %13, %15 : vector<32x128xf32>
      %18 = arith.addf %16, %17 : vector<32x128xf32>
      %19 = arith.mulf %12, %12 : vector<32x128xf32>
      %20 = arith.mulf %13, %13 : vector<32x128xf32>
      %21 = arith.addf %19, %20 : vector<32x128xf32>
      %22 = math.sqrt %21 : vector<32x128xf32>
      %23 = arith.mulf %14, %14 : vector<32x128xf32>
      %24 = arith.mulf %15, %15 : vector<32x128xf32>
      %25 = arith.addf %23, %24 : vector<32x128xf32>
      %26 = math.sqrt %25 : vector<32x128xf32>
      %27 = arith.mulf %22, %26 : vector<32x128xf32>
      %cst_15 = arith.constant 9.99999993E-9 : f32
      %28 = vector.broadcast %cst_15 : f32 to vector<32x128xf32>
      %29 = arith.addf %27, %28 : vector<32x128xf32>
      %30 = tpu.reciprocal %29 {approx = true} : vector<32x128xf32> -> vector<32x128xf32>
      %31 = arith.mulf %29, %30 : vector<32x128xf32>
      %cst_16 = arith.constant 2.000000e+00 : f32
      %32 = vector.broadcast %cst_16 : f32 to vector<32x128xf32>
      %33 = arith.subf %32, %31 : vector<32x128xf32>
      %34 = arith.mulf %30, %33 : vector<32x128xf32>
      %35 = arith.mulf %18, %34 : vector<32x128xf32>
      %36 = tpu.iota {dimensions = array<i32: 0>} : vector<32x128xi32>
      %c16_i32 = arith.constant 16 : i32
      %37 = vector.broadcast %c16_i32 : i32 to vector<32x128xi32>
      %38 = arith.cmpi slt, %36, %37 : vector<32x128xi32>
      %cst_17 = arith.constant 0.000000e+00 : f32
      %39 = vector.broadcast %cst_17 : f32 to vector<32x128xf32>
      %40 = arith.select %38, %35, %39 : vector<32x128xi1>, vector<32x128xf32>
      %41 = vector.shape_cast %40 : vector<32x128xf32> to vector<4x8x128xf32>
      %cst_18 = arith.constant dense<0.000000e+00> : vector<8x128xf32>
      %42 = vector.multi_reduction <add>, %41, %cst_18 [0] : vector<4x8x128xf32> to vector<8x128xf32>
      %43 = arith.addf %11, %42 : vector<8x128xf32>
      %44 = arith.addf %5, %43 : vector<8x128xf32>
      %c0_19 = arith.constant 0 : index
      %c0_20 = arith.constant 0 : index
      %c0_21 = arith.constant 0 : index
      %45 = vector.load %arg5[%c0_19, %c0_20, %c0_21] : memref<1x8x128xf32, #tpu.memory_space<vmem>>, vector<1x8x128xf32>
      %46 = vector.shape_cast %45 : vector<1x8x128xf32> to vector<8x128xf32>
      %47 = vector.shape_cast %44 : vector<8x128xf32> to vector<1x8x128xf32>
      tpu.vector_store %arg5[%c0_19, %c0_20, %c0_21], %47 {strides = array<i32>} : memref<1x8x128xf32, #tpu.memory_space<vmem>>, vector<1x8x128xf32>,
    } else {
    }
    return
  }
  func.func @transform_0(%arg0: i32) -> (i32, i32) {
    %c0_i32 = arith.constant 0 : i32
    %c0_i32_0 = arith.constant 0 : i32
    return %arg0, %c0_i32 : i32, i32
  }
  func.func @transform_1(%arg0: i32) -> (i32, i32) {
    %c0_i32 = arith.constant 0 : i32
    %c0_i32_0 = arith.constant 0 : i32
    return %arg0, %c0_i32 : i32, i32
  }
  func.func @transform_2(%arg0: i32) -> (i32, i32) {
    %c0_i32 = arith.constant 0 : i32
    %c0_i32_0 = arith.constant 0 : i32
    return %arg0, %c0_i32 : i32, i32
  }
  func.func @transform_3(%arg0: i32) -> (i32, i32) {
    %c0_i32 = arith.constant 0 : i32
    %c0_i32_0 = arith.constant 0 : i32
    return %arg0, %c0_i32 : i32, i32
  }
  func.func @transform_4(%arg0: i32) -> (i32, i32, i32) {
    %c0_i32 = arith.constant 0 : i32
    %c0_i32_0 = arith.constant 0 : i32
    %c0_i32_1 = arith.constant 0 : i32
    return %arg0, %c0_i32, %c0_i32_0 : i32, i32, i32
  }
}

</mosaic_0001>

<llo_original>
// kernel: gradient_cosine_loss.1
$region0: #{gradient_cosine_loss.1}
  #allocation0 [shape = 'u32[]', space=smem, size = 0x4, offset = 0x4, fixed_abs, tag = 'smem constant byte address 0x4 - core index']
  #allocation1 [shape = 'u32[144,128]{1,0:T(1,128)}', space=vmem, size = 0x12000, scoped, tag = 'internal scratch']
  %s0 = inlined_call_operand.vmem [shape: f32[16,128], index: 0, kind: input, shape index: {}]
  %s1 = inlined_call_operand.vmem [shape: f32[16,128], index: 1, kind: input, shape index: {}]
  %s2 = inlined_call_operand.vmem [shape: f32[16,128], index: 2, kind: input, shape index: {}]
  %s3 = inlined_call_operand.vmem [shape: f32[16,128], index: 3, kind: input, shape index: {}]
  %s4 = inlined_call_operand.vmem [shape: f32[1,8,128], index: 4, kind: output, shape index: {}]
  %s5 = sld [smem:[#allocation0]]
  $region37: #{gradient_cosine_loss.1} parent=0
    _
  %s7 = ssub.s32 1, %s5
  %s8 = scalar_select 0, %s7, %s5
  // Predicated region
  $region2: #{gradient_cosine_loss.1} parent=0 // pred_check
    _
  $region3: #{gradient_cosine_loss.1} parent=0 // pred_check_branch
    %10 = sbr.rel (0) target = $region5
  $region4: #{gradient_cosine_loss.1} parent=0 // pred_region
    _
  $region5: #{gradient_cosine_loss.1} parent=0 // pred_fallthru
    _
  // Predicated region
  $region6: #{gradient_cosine_loss.1} parent=0 // pred_check
    _
  $region7: #{gradient_cosine_loss.1} parent=0 // pred_check_branch
    %12 = sbr.rel (0) target = $region9
  $region8: #{gradient_cosine_loss.1} parent=0 // pred_region
    _
  $region9: #{gradient_cosine_loss.1} parent=0 // pred_fallthru
    _
  // Predicated region
  $region10: #{gradient_cosine_loss.1} parent=0 // pred_check
    _
  $region11: #{gradient_cosine_loss.1} parent=0 // pred_check_branch
    %14 = sbr.rel (0) target = $region13
  $region12: #{gradient_cosine_loss.1} parent=0 // pred_region
    _
  $region13: #{gradient_cosine_loss.1} parent=0 // pred_fallthru
    _
  // Predicated region
  $region14: #{gradient_cosine_loss.1} parent=0 // pred_check
    _
  $region15: #{gradient_cosine_loss.1} parent=0 // pred_check_branch
    %16 = sbr.rel (0) target = $region17
  $region16: #{gradient_cosine_loss.1} parent=0 // pred_region
    _
  $region17: #{gradient_cosine_loss.1} parent=0 // pred_fallthru
    _
  %p17 = scmp.eq.s32.totalorder 0, 0
  %p18 = scmp.ne.s32.totalorder 0, 0
  %s19 = scalar_select %p18, 1, 0
  // While loop
  $region18: #{gradient_cosine_loss.1} parent=0 // loop_pre_header
    _
  $region19: #{gradient_cosine_loss.1} parent=0 // loop_header
    %s21 = sphi 0, %s23
    %p22 = scmp.ge.s32.totalorder %s21, %s19
    %v26 = vphi 0.0, %v171
  $region20: #{gradient_cosine_loss.1} parent=0 // loop_header_branch
    %25 = sbr.rel (%p22) target = $region24
  $region21: #{gradient_cosine_loss.1} parent=0 // loop_body
    %s27 = smul.u32 %s21, 32
    %s28 = scalar_lea.vmem %s0, %s27
    %v29 = vld [vmem:[%s28] sm:$0xff]
    %v30 = vld [vmem:[%s28 + $0x8] sm:$0xff]
    %v31 = vld [vmem:[%s28 + $0x10] sm:$0xff]
    %v32 = vld [vmem:[%s28 + $0x18] sm:$0xff]
    %s33 = scalar_lea.vmem %s1, %s27
    %v34 = vld [vmem:[%s33] sm:$0xff]
    %v35 = vld [vmem:[%s33 + $0x8] sm:$0xff]
    %v36 = vld [vmem:[%s33 + $0x10] sm:$0xff]
    %v37 = vld [vmem:[%s33 + $0x18] sm:$0xff]
    %s38 = scalar_lea.vmem %s2, %s27
    %v39 = vld [vmem:[%s38] sm:$0xff]
    %v40 = vld [vmem:[%s38 + $0x8] sm:$0xff]
    %v41 = vld [vmem:[%s38 + $0x10] sm:$0xff]
    %v42 = vld [vmem:[%s38 + $0x18] sm:$0xff]
    %s43 = scalar_lea.vmem %s3, %s27
    %v44 = vld [vmem:[%s43] sm:$0xff]
    %v45 = vld [vmem:[%s43 + $0x8] sm:$0xff]
    %v46 = vld [vmem:[%s43 + $0x10] sm:$0xff]
    %v47 = vld [vmem:[%s43 + $0x18] sm:$0xff]
    %v48 = vmul.f32 %v29, %v39
    %v49 = vmul.f32 %v30, %v40
    %v50 = vmul.f32 %v31, %v41
    %v51 = vmul.f32 %v32, %v42
    %v52 = vmul.f32 %v34, %v44
    %v53 = vmul.f32 %v35, %v45
    %v54 = vmul.f32 %v36, %v46
    %v55 = vmul.f32 %v37, %v47
    %v56 = vadd.f32 %v48, %v52
    %v57 = vadd.f32 %v49, %v53
    %v58 = vadd.f32 %v50, %v54
    %v59 = vadd.f32 %v51, %v55
    %v60 = vmul.f32 %v29, %v29
    %v61 = vmul.f32 %v30, %v30
    %v62 = vmul.f32 %v31, %v31
    %v63 = vmul.f32 %v32, %v32
    %v64 = vmul.f32 %v34, %v34
    %v65 = vmul.f32 %v35, %v35
    %v66 = vmul.f32 %v36, %v36
    %v67 = vmul.f32 %v37, %v37
    %v68 = vadd.f32 %v60, %v64
    %v69 = vadd.f32 %v61, %v65
    %v70 = vadd.f32 %v62, %v66
    %v71 = vadd.f32 %v63, %v67
    %v72 = vrsqrt.pop %v68
    %v73 = vmul.f32 %v68, %v72
    %vm74 = vcmp.eq.f32.partialorder %v68, inf
    %v75 = vsel %vm74, %v68, %v73
    %vm76 = vcmp.eq.f32.partialorder %v68, 0.0
    %v77 = vand.u32 %v68, 2147483648
    %v78 = vsel %vm76, %v77, %v75
    %v79 = vrsqrt.pop %v69
    %v80 = vmul.f32 %v69, %v79
    %vm81 = vcmp.eq.f32.partialorder %v69, inf
    %v82 = vsel %vm81, %v69, %v80
    %vm83 = vcmp.eq.f32.partialorder %v69, 0.0
    %v84 = vand.u32 %v69, 2147483648
    %v85 = vsel %vm83, %v84, %v82
    %v86 = vrsqrt.pop %v70
    %v87 = vmul.f32 %v70, %v86
    %vm88 = vcmp.eq.f32.partialorder %v70, inf
    %v89 = vsel %vm88, %v70, %v87
    %vm90 = vcmp.eq.f32.partialorder %v70, 0.0
    %v91 = vand.u32 %v70, 2147483648
    %v92 = vsel %vm90, %v91, %v89
    %v93 = vrsqrt.pop %v71
    %v94 = vmul.f32 %v71, %v93
    %vm95 = vcmp.eq.f32.partialorder %v71, inf
    %v96 = vsel %vm95, %v71, %v94
    %vm97 = vcmp.eq.f32.partialorder %v71, 0.0
    %v98 = vand.u32 %v71, 2147483648
    %v99 = vsel %vm97, %v98, %v96
    %v100 = vmul.f32 %v39, %v39
    %v101 = vmul.f32 %v40, %v40
    %v102 = vmul.f32 %v41, %v41
    %v103 = vmul.f32 %v42, %v42
    %v104 = vmul.f32 %v44, %v44
    %v105 = vmul.f32 %v45, %v45
    %v106 = vmul.f32 %v46, %v46
    %v107 = vmul.f32 %v47, %v47
    %v108 = vadd.f32 %v100, %v104
    %v109 = vadd.f32 %v101, %v105
    %v110 = vadd.f32 %v102, %v106
    %v111 = vadd.f32 %v103, %v107
    %v112 = vrsqrt.pop %v108
    %v113 = vmul.f32 %v108, %v112
    %vm114 = vcmp.eq.f32.partialorder %v108, inf
    %v115 = vsel %vm114, %v108, %v113
    %vm116 = vcmp.eq.f32.partialorder %v108, 0.0
    %v117 = vand.u32 %v108, 2147483648
    %v118 = vsel %vm116, %v117, %v115
    %v119 = vrsqrt.pop %v109
    %v120 = vmul.f32 %v109, %v119
    %vm121 = vcmp.eq.f32.partialorder %v109, inf
    %v122 = vsel %vm121, %v109, %v120
    %vm123 = vcmp.eq.f32.partialorder %v109, 0.0
    %v124 = vand.u32 %v109, 2147483648
    %v125 = vsel %vm123, %v124, %v122
    %v126 = vrsqrt.pop %v110
    %v127 = vmul.f32 %v110, %v126
    %vm128 = vcmp.eq.f32.partialorder %v110, inf
    %v129 = vsel %vm128, %v110, %v127
    %vm130 = vcmp.eq.f32.partialorder %v110, 0.0
    %v131 = vand.u32 %v110, 2147483648
    %v132 = vsel %vm130, %v131, %v129
    %v133 = vrsqrt.pop %v111
    %v134 = vmul.f32 %v111, %v133
    %vm135 = vcmp.eq.f32.partialorder %v111, inf
    %v136 = vsel %vm135, %v111, %v134
    %vm137 = vcmp.eq.f32.partialorder %v111, 0.0
    %v138 = vand.u32 %v111, 2147483648
    %v139 = vsel %vm137, %v138, %v136
    %v140 = vmul.f32 %v78, %v118
    %v141 = vmul.f32 %v85, %v125
    %v142 = vmul.f32 %v92, %v132
    %v143 = vmul.f32 %v99, %v139
    %v144 = vadd.f32 %v140, 1e-08
    %v145 = vadd.f32 %v141, 1e-08
    %v146 = vadd.f32 %v142, 1e-08
    %v147 = vadd.f32 %v143, 1e-08
    %v148 = vrcp.pop %v144
    %v149 = vrcp.pop %v145
    %v150 = vrcp.pop %v146
    %v151 = vrcp.pop %v147
    %v152 = vmul.f32 %v144, %v148
    %v153 = vmul.f32 %v145, %v149
    %v154 = vmul.f32 %v146, %v150
    %v155 = vmul.f32 %v147, %v151
    %v156 = vsub.f32 2.0, %v152
    %v157 = vsub.f32 2.0, %v153
    %v158 = vsub.f32 2.0, %v154
    %v159 = vsub.f32 2.0, %v155
    %v160 = vmul.f32 %v148, %v156
    %v161 = vmul.f32 %v149, %v157
    %v162 = vmul.f32 %v150, %v158
    %v163 = vmul.f32 %v151, %v159
    %v164 = vmul.f32 %v56, %v160
    %v165 = vmul.f32 %v57, %v161
    %v166 = vmul.f32 %v58, %v162
    %v167 = vmul.f32 %v59, %v163
    %v168 = vadd.f32 %v164, %v165
    %v169 = vadd.f32 %v168, %v166
    %v170 = vadd.f32 %v169, %v167
    %v171 = vadd.f32 %v26, %v170
  $region22: #{gradient_cosine_loss.1} parent=0 // loop_footer
    %s23 = sadd.s32 %s21, 1
  $region23: #{gradient_cosine_loss.1} parent=0 // loop_footer_branch
    %20 = sbr.rel target = $region19
  $region24: #{gradient_cosine_loss.1} parent=0 // loop_exit
    _
  %172 = vst [vmem:[%s4] sm:$0xff] %v26
  // Predicated region
  $region25: #{gradient_cosine_loss.1} parent=0 // pred_check
    %p173 = pneg %p17
  $region26: #{gradient_cosine_loss.1} parent=0 // pred_check_branch
    %175 = sbr.rel (%p173) target = $region28
  $region27: #{gradient_cosine_loss.1} parent=0 // pred_region
    %v176 = vld [vmem:[%s0] sm:$0xff]
    %v177 = vld [vmem:[%s0 + $0x8] sm:$0xff]
    %v178 = vld [vmem:[%s0 + $0x10] sm:$0xff]
    %v179 = vld [vmem:[%s0 + $0x18] sm:$0xff]
    %v180 = vld [vmem:[%s1] sm:$0xff]
    %v181 = vld [vmem:[%s1 + $0x8] sm:$0xff]
    %v182 = vld [vmem:[%s1 + $0x10] sm:$0xff]
    %v183 = vld [vmem:[%s1 + $0x18] sm:$0xff]
    %v184 = vld [vmem:[%s2] sm:$0xff]
    %v185 = vld [vmem:[%s2 + $0x8] sm:$0xff]
    %v186 = vld [vmem:[%s2 + $0x10] sm:$0xff]
    %v187 = vld [vmem:[%s2 + $0x18] sm:$0xff]
    %v188 = vld [vmem:[%s3] sm:$0xff]
    %v189 = vld [vmem:[%s3 + $0x8] sm:$0xff]
    %v190 = vld [vmem:[%s3 + $0x10] sm:$0xff]
    %v191 = vld [vmem:[%s3 + $0x18] sm:$0xff]
    %v192 = vmul.f32 %v176, %v184
    %v193 = vmul.f32 %v177, %v185
    %v194 = vmul.f32 %v178, %v186
    %v195 = vmul.f32 %v179, %v187
    %v196 = vmul.f32 %v180, %v188
    %v197 = vmul.f32 %v181, %v189
    %v198 = vmul.f32 %v182, %v190
    %v199 = vmul.f32 %v183, %v191
    %v200 = vadd.f32 %v192, %v196
    %v201 = vadd.f32 %v193, %v197
    %v202 = vadd.f32 %v194, %v198
    %v203 = vadd.f32 %v195, %v199
    %v204 = vmul.f32 %v176, %v176
    %v205 = vmul.f32 %v177, %v177
    %v206 = vmul.f32 %v178, %v178
    %v207 = vmul.f32 %v179, %v179
    %v208 = vmul.f32 %v180, %v180
    %v209 = vmul.f32 %v181, %v181
    %v210 = vmul.f32 %v182, %v182
    %v211 = vmul.f32 %v183, %v183
    %v212 = vadd.f32 %v204, %v208
    %v213 = vadd.f32 %v205, %v209
    %v214 = vadd.f32 %v206, %v210
    %v215 = vadd.f32 %v207, %v211
    %v216 = vrsqrt.pop %v212
    %v217 = vmul.f32 %v212, %v216
    %vm218 = vcmp.eq.f32.partialorder %v212, inf
    %v219 = vsel %vm218, %v212, %v217
    %vm220 = vcmp.eq.f32.partialorder %v212, 0.0
    %v221 = vand.u32 %v212, 2147483648
    %v222 = vsel %vm220, %v221, %v219
    %v223 = vrsqrt.pop %v213
    %v224 = vmul.f32 %v213, %v223
    %vm225 = vcmp.eq.f32.partialorder %v213, inf
    %v226 = vsel %vm225, %v213, %v224
    %vm227 = vcmp.eq.f32.partialorder %v213, 0.0
    %v228 = vand.u32 %v213, 2147483648
    %v229 = vsel %vm227, %v228, %v226
    %v230 = vrsqrt.pop %v214
    %v231 = vmul.f32 %v214, %v230
    %vm232 = vcmp.eq.f32.partialorder %v214, inf
    %v233 = vsel %vm232, %v214, %v231
    %vm234 = vcmp.eq.f32.partialorder %v214, 0.0
    %v235 = vand.u32 %v214, 2147483648
    %v236 = vsel %vm234, %v235, %v233
    %v237 = vrsqrt.pop %v215
    %v238 = vmul.f32 %v215, %v237
    %vm239 = vcmp.eq.f32.partialorder %v215, inf
    %v240 = vsel %vm239, %v215, %v238
    %vm241 = vcmp.eq.f32.partialorder %v215, 0.0
    %v242 = vand.u32 %v215, 2147483648
    %v243 = vsel %vm241, %v242, %v240
    %v244 = vmul.f32 %v184, %v184
    %v245 = vmul.f32 %v185, %v185
    %v246 = vmul.f32 %v186, %v186
    %v247 = vmul.f32 %v187, %v187
    %v248 = vmul.f32 %v188, %v188
    %v249 = vmul.f32 %v189, %v189
    %v250 = vmul.f32 %v190, %v190
    %v251 = vmul.f32 %v191, %v191
    %v252 = vadd.f32 %v244, %v248
    %v253 = vadd.f32 %v245, %v249
    %v254 = vadd.f32 %v246, %v250
    %v255 = vadd.f32 %v247, %v251
    %v256 = vrsqrt.pop %v252
    %v257 = vmul.f32 %v252, %v256
    %vm258 = vcmp.eq.f32.partialorder %v252, inf
    %v259 = vsel %vm258, %v252, %v257
    %vm260 = vcmp.eq.f32.partialorder %v252, 0.0
    %v261 = vand.u32 %v252, 2147483648
    %v262 = vsel %vm260, %v261, %v259
    %v263 = vrsqrt.pop %v253
    %v264 = vmul.f32 %v253, %v263
    %vm265 = vcmp.eq.f32.partialorder %v253, inf
    %v266 = vsel %vm265, %v253, %v264
    %vm267 = vcmp.eq.f32.partialorder %v253, 0.0
    %v268 = vand.u32 %v253, 2147483648
    %v269 = vsel %vm267, %v268, %v266
    %v270 = vrsqrt.pop %v254
    %v271 = vmul.f32 %v254, %v270
    %vm272 = vcmp.eq.f32.partialorder %v254, inf
    %v273 = vsel %vm272, %v254, %v271
    %vm274 = vcmp.eq.f32.partialorder %v254, 0.0
    %v275 = vand.u32 %v254, 2147483648
    %v276 = vsel %vm274, %v275, %v273
    %v277 = vrsqrt.pop %v255
    %v278 = vmul.f32 %v255, %v277
    %vm279 = vcmp.eq.f32.partialorder %v255, inf
    %v280 = vsel %vm279, %v255, %v278
    %vm281 = vcmp.eq.f32.partialorder %v255, 0.0
    %v282 = vand.u32 %v255, 2147483648
    %v283 = vsel %vm281, %v282, %v280
    %v284 = vmul.f32 %v222, %v262
    %v285 = vmul.f32 %v229, %v269
    %v286 = vmul.f32 %v236, %v276
    %v287 = vmul.f32 %v243, %v283
    %v288 = vadd.f32 %v284, 1e-08
    %v289 = vadd.f32 %v285, 1e-08
    %v290 = vadd.f32 %v286, 1e-08
    %v291 = vadd.f32 %v287, 1e-08
    %v292 = vrcp.pop %v288
    %v293 = vrcp.pop %v289
    %v294 = vrcp.pop %v290
    %v295 = vrcp.pop %v291
    %v296 = vmul.f32 %v288, %v292
    %v297 = vmul.f32 %v289, %v293
    %v298 = vmul.f32 %v290, %v294
    %v299 = vmul.f32 %v291, %v295
    %v300 = vsub.f32 2.0, %v296
    %v301 = vsub.f32 2.0, %v297
    %v302 = vsub.f32 2.0, %v298
    %v303 = vsub.f32 2.0, %v299
    %v304 = vmul.f32 %v292, %v300
    %v305 = vmul.f32 %v293, %v301
    %v306 = vmul.f32 %v294, %v302
    %v307 = vmul.f32 %v295, %v303
    %v308 = vmul.f32 %v200, %v304
    %v309 = vmul.f32 %v201, %v305
    %v310 = vmul.f32 %v202, %v306
    %v311 = vmul.f32 %v203, %v307
    %v312 = vlaneseq
    %v313 = vshrl.u32 %v312, 7
    %v314 = vadd.s32 %v313, 8
    %v315 = vadd.s32 %v313, 16
    %v316 = vadd.s32 %v313, 24
    %vm317 = vcmp.lt.s32.totalorder %v313, 16
    %vm318 = vcmp.lt.s32.totalorder %v314, 16
    %vm319 = vcmp.lt.s32.totalorder %v315, 16
    %vm320 = vcmp.lt.s32.totalorder %v316, 16
    %v321 = vsel %vm317, %v308, 0.0
    %v322 = vsel %vm318, %v309, 0.0
    %v323 = vsel %vm319, %v310, 0.0
    %v324 = vsel %vm320, %v311, 0.0
    %v325 = vadd.f32 %v321, %v322
    %v326 = vadd.f32 %v325, %v323
    %v327 = vadd.f32 %v326, %v324
    %v328 = vadd.f32 %v327, 0.0
    %v329 = vadd.f32 %v26, %v328
    %330 = vst [vmem:[%s4] sm:$0xff] %v329
  $region28: #{gradient_cosine_loss.1} parent=0 // pred_fallthru
    _
  // Predicated region
  $region29: #{gradient_cosine_loss.1} parent=0 // pred_check
    _
  $region30: #{gradient_cosine_loss.1} parent=0 // pred_check_branch
    %332 = sbr.rel (0) target = $region32
  $region31: #{gradient_cosine_loss.1} parent=0 // pred_region
    _
  $region32: #{gradient_cosine_loss.1} parent=0 // pred_fallthru
    _
  // Predicated region
  $region33: #{gradient_cosine_loss.1} parent=0 // pred_check
    _
  $region34: #{gradient_cosine_loss.1} parent=0 // pred_check_branch
    %334 = sbr.rel (0) target = $region36
  $region35: #{gradient_cosine_loss.1} parent=0 // pred_region
    _
  $region36: #{gradient_cosine_loss.1} parent=0 // pred_fallthru
    _

</llo_original>
